<compile_context>
chip_gen: v7x
topology: tpu7x:2x2x1
jax: 0.10.0
libtpu: 0.0.40
codegen_flags: <defaults>
</compile_context>

<pallas_src>
import functools

import numpy as np
import jax
import jax.numpy as jnp
from jax.experimental import pallas as pl
from jax.experimental.pallas import tpu as pltpu


# ---------------------------------------------------------------------------
# DFT matrices, cached per (N, dtype) so repeated calls pay nothing.
# ---------------------------------------------------------------------------
@functools.lru_cache(maxsize=8)
def _dft_matrices(n, dtype_name):
    k = np.arange(n, dtype=np.float64)
    ang = 2.0 * np.pi * np.outer(k, k) / n          # symmetric
    cos_m = jnp.asarray(np.cos(ang), dtype=dtype_name)
    sin_m = jnp.asarray(np.sin(ang), dtype=dtype_name)
    return cos_m, sin_m


# ---------------------------------------------------------------------------
# Tile size + VMEM budget.  Conservative cap so the same choice fits v7x
# (64 MiB physical VMEM) as well as v5e/v6e (128 MiB).
# ---------------------------------------------------------------------------
def _choose_tile_and_vmem(m, n, dft_itemsize):
    resident = (2 * n * n + 2 * n * (n // 4)) * dft_itemsize + (n // 4 + n) * 4

    def budget(tm):
        io_tiles = 2 * 4 * tm * n * 4          # double-buffered a, b, o_re, o_im (f32)
        temps = 10 * (2 * tm) * n * 4          # live (2*tm, N) f32 intermediates
        return resident + io_tiles + temps

    cap = 40 * 1024 * 1024
    tm = min(256, max(8, ((m + 7) // 8) * 8))
    while tm > 8 and budget(tm) > cap:
        tm //= 2
    vmem_limit = min(max(int(budget(tm) * 1.5), 16 * 1024 * 1024), 48 * 1024 * 1024)
    return tm, vmem_limit


# ---------------------------------------------------------------------------
# Kernel: one (TM, N) row tile of the real plane (a) and imag plane (b).
# ---------------------------------------------------------------------------
def _fdd_kernel(a_ref, b_ref, cos_ref, sin_ref,
                w1_ref, b1_ref, w2_ref, b2_ref,
                ore_ref, oim_ref):
    tm = a_ref.shape[0]
    n = cos_ref.shape[0]
    cdt = cos_ref.dtype                           # bf16 (default) or f32

    a = a_ref[...]                                # (TM, N) f32
    b = b_ref[...]                                # (TM, N) f32
    cm = cos_ref[...]                             # (N, N)
    sm = sin_ref[...]                             # (N, N)

    # Stack real/imag rows: 2 DFT matmuls instead of 4 (halves weight pushes).
    x2 = jnp.concatenate([a, b], axis=0).astype(cdt)                  # (2*TM, N)
    xc = jnp.dot(x2, cm, preferred_element_type=jnp.float32)          # [a@C ; b@C]
    xs = jnp.dot(x2, sm, preferred_element_type=jnp.float32)          # [a@S ; b@S]

    # FFT(a + i b): re = a@C + b@S ; im = b@C - a@S
    re = xc[:tm] + xs[tm:]
    im = xc[tm:] - xs[:tm]
    f = jnp.concatenate([re, im], axis=0)                             # (2*TM, N) f32

    # TinyMLP applied once on the stacked rows (f32 weights; K = N//4 is small
    # so this is not the MXU bottleneck).
    h1 = jnp.dot(f, w1_ref[...], preferred_element_type=jnp.float32) + b1_ref[...]
    h1 = jnp.maximum(h1, 0.0)
    h = jnp.tanh(jnp.dot(h1, w2_ref[...], preferred_element_type=jnp.float32)
                 + b2_ref[...])

    # Frequency-domain gating: g = [u ; v] = h * f
    g = (h * f).astype(cdt)
    gc = jnp.dot(g, cm, preferred_element_type=jnp.float32)           # [u@C ; v@C]
    gs = jnp.dot(g, sm, preferred_element_type=jnp.float32)           # [u@S ; v@S]

    # IFFT(u + i v): re = (u@C - v@S)/N ; im = (u@S + v@C)/N
    inv_n = jnp.float32(1.0 / n)
    o_re = (gc[:tm] - gs[tm:]) * inv_n
    o_im = (gs[:tm] + gc[tm:]) * inv_n

    # Residual with the original input.
    ore_ref[...] = (o_re + a).astype(ore_ref.dtype)
    oim_ref[...] = (o_im + b).astype(oim_ref.dtype)


# ---------------------------------------------------------------------------
# Wrapper
# ---------------------------------------------------------------------------
def frequency_domain_denoising(x, w1, b1, w2, b2, *, dft_dtype=jnp.bfloat16):
    """x: (B, C, 2, N) f32; w1: (N//4, N); b1: (N//4,); w2: (N, N//4); b2: (N,)."""
    B, C, two, N = x.shape
    assert two == 2
    M = B * C

    a = x[:, :, 0, :].reshape(M, N).astype(jnp.float32)
    b = x[:, :, 1, :].reshape(M, N).astype(jnp.float32)

    dt = np.dtype(dft_dtype)
    cos_m, sin_m = _dft_matrices(N, dt.name)
    TM, vmem_limit = _choose_tile_and_vmem(M, N, dt.itemsize)

    row = lambda i: (i, 0)        # tiled over M, pipelined
    const = lambda i: (0, 0)      # resident across the grid

    grid_spec = pltpu.PrefetchScalarGridSpec(
        num_scalar_prefetch=0,
        grid=(pl.cdiv(M, TM),),
        in_specs=[
            pl.BlockSpec((TM, N), row),           # a
            pl.BlockSpec((TM, N), row),           # b
            pl.BlockSpec((N, N), const),          # cos
            pl.BlockSpec((N, N), const),          # sin
            pl.BlockSpec((N, N // 4), const),     # w1^T
            pl.BlockSpec((1, N // 4), const),     # b1
            pl.BlockSpec((N // 4, N), const),     # w2^T
            pl.BlockSpec((1, N), const),          # b2
        ],
        out_specs=(pl.BlockSpec((TM, N), row),
                   pl.BlockSpec((TM, N), row)),
    )

    o_re, o_im = pl.pallas_call(
        _fdd_kernel,
        out_shape=(jax.ShapeDtypeStruct((M, N), jnp.float32),
                   jax.ShapeDtypeStruct((M, N), jnp.float32)),
        grid_spec=grid_spec,
        compiler_params=pltpu.CompilerParams(
            dimension_semantics=("parallel",),     # megacore on v7x
            vmem_limit_bytes=vmem_limit),
    )(a, b, cos_m, sin_m,
      w1.T.astype(jnp.float32), b1.reshape(1, -1).astype(jnp.float32),
      w2.T.astype(jnp.float32), b2.reshape(1, -1).astype(jnp.float32))

    out = jnp.stack([o_re.reshape(B, C, N), o_im.reshape(B, C, N)], axis=2)
    return out


# ---------------------------------------------------------------------------
# Pure-JAX reference mirroring the PyTorch forward.
# ---------------------------------------------------------------------------
def reference(x, w1, b1, w2, b2):
    r = x[:, :, 0, :] + 1j * x[:, :, 1, :]
    r = jnp.fft.fft(r, axis=-1)
    x_fft = jnp.stack([jnp.real(r), jnp.imag(r)], axis=2).astype(jnp.float32)
    h1 = jnp.maximum(x_fft @ w1.T + b1, 0.0)
    h = jnp.tanh(h1 @ w2.T + b2)
    x_h = h[:, :, 0, :] * x_fft[:, :, 0, :] + 1j * (h[:, :, 1, :] * x_fft[:, :, 1, :])
    x_h = jnp.fft.ifft(x_h, axis=-1)
    r_ = jnp.stack([jnp.real(x_h), jnp.imag(x_h)], axis=2).astype(jnp.float32)
    return r_ + x


if __name__ == "__main__":
    B, C, N = 2, 4, 16
    key = jax.random.PRNGKey(0)
    kx, k1, k2, k3, k4 = jax.random.split(key, 5)

    x = jax.random.normal(kx, (B, C, 2, N), dtype=jnp.float32)

    # TinyMLP(N): Linear(N, N//4) -> ReLU -> Linear(N//4, N) -> Tanh
    n4 = N // 4
    w1 = jax.random.normal(k1, (n4, N), dtype=jnp.float32) * (1.0 / jnp.sqrt(N))
    b1 = jax.random.normal(k2, (n4,), dtype=jnp.float32) * 0.1
    w2 = jax.random.normal(k3, (N, n4), dtype=jnp.float32) * (1.0 / jnp.sqrt(n4))
    b2 = jax.random.normal(k4, (N,), dtype=jnp.float32) * 0.1

    # f32 DFT path: bit-level semantic check against jnp.fft.
    out_f32 = frequency_domain_denoising(x, w1, b1, w2, b2, dft_dtype=jnp.float32)
    # bf16 DFT path (default / fast): looser tolerance; error grows with N —
    # re-validate at production N per the review.
    out_bf16 = frequency_domain_denoising(x, w1, b1, w2, b2)
    jax.block_until_ready((out_f32, out_bf16))

    ref = reference(x, w1, b1, w2, b2)
    assert out_f32.shape == (B, C, 2, N)
    assert out_bf16.shape == (B, C, 2, N)
    assert jnp.allclose(out_f32, ref, rtol=1e-4, atol=1e-4), "f32 mismatch vs reference"
    assert jnp.allclose(out_bf16, ref, rtol=5e-2, atol=1.5e-1), "bf16 mismatch vs reference"

    print("KERNEL_OK")
</pallas_src>

<mosaic_0001>
module attributes {stable_mosaic.version = 11 : i64} {
  func.func @_fdd_kernel(%arg0: i32, %arg1: memref<8x16xf32, #tpu.memory_space<vmem>>, %arg2: memref<8x16xf32, #tpu.memory_space<vmem>>, %arg3: memref<16x16xf32, #tpu.memory_space<vmem>>, %arg4: memref<16x16xf32, #tpu.memory_space<vmem>>, %arg5: memref<16x4xf32, #tpu.memory_space<vmem>>, %arg6: memref<1x4xf32, #tpu.memory_space<vmem>>, %arg7: memref<4x16xf32, #tpu.memory_space<vmem>>, %arg8: memref<1x16xf32, #tpu.memory_space<vmem>>, %arg9: memref<8x16xf32, #tpu.memory_space<vmem>>, %arg10: memref<8x16xf32, #tpu.memory_space<vmem>>) attributes {dimension_semantics = [#tpu.dimension_semantics<parallel>], iteration_bounds = array<i64: 1>, scalar_prefetch = 0 : i64, scratch_operands = 0 : i64, tpu.core_type = #tpu.core_type<tc>, window_params = [{transform_indices = @transform_0, window_bounds = array<i64: 8, 16>}, {transform_indices = @transform_1, window_bounds = array<i64: 8, 16>}, {pipeline_mode = #tpu.pipeline_mode<synchronous>, transform_indices = @transform_2, window_bounds = array<i64: 16, 16>}, {pipeline_mode = #tpu.pipeline_mode<synchronous>, transform_indices = @transform_3, window_bounds = array<i64: 16, 16>}, {pipeline_mode = #tpu.pipeline_mode<synchronous>, transform_indices = @transform_4, window_bounds = array<i64: 16, 4>}, {pipeline_mode = #tpu.pipeline_mode<synchronous>, transform_indices = @transform_5, window_bounds = array<i64: 1, 4>}, {pipeline_mode = #tpu.pipeline_mode<synchronous>, transform_indices = @transform_6, window_bounds = array<i64: 4, 16>}, {pipeline_mode = #tpu.pipeline_mode<synchronous>, transform_indices = @transform_7, window_bounds = array<i64: 1, 16>}, {transform_indices = @transform_8, window_bounds = array<i64: 8, 16>}, {transform_indices = @transform_9, window_bounds = array<i64: 8, 16>}]} {
    %c0 = arith.constant 0 : index
    %c0_0 = arith.constant 0 : index
    %0 = vector.load %arg1[%c0, %c0_0] : memref<8x16xf32, #tpu.memory_space<vmem>>, vector<8x16xf32>
    %c0_1 = arith.constant 0 : index
    %c0_2 = arith.constant 0 : index
    %1 = vector.load %arg2[%c0_1, %c0_2] : memref<8x16xf32, #tpu.memory_space<vmem>>, vector<8x16xf32>
    %c0_3 = arith.constant 0 : index
    %c0_4 = arith.constant 0 : index
    %2 = vector.load %arg3[%c0_3, %c0_4] : memref<16x16xf32, #tpu.memory_space<vmem>>, vector<16x16xf32>
    %c0_5 = arith.constant 0 : index
    %c0_6 = arith.constant 0 : index
    %3 = vector.load %arg4[%c0_5, %c0_6] : memref<16x16xf32, #tpu.memory_space<vmem>>, vector<16x16xf32>
    %4 = tpu.concatenate %0, %1 in 0 : vector<8x16xf32>, vector<8x16xf32> -> vector<16x16xf32>
    %cst = arith.constant dense<0.000000e+00> : vector<16x16xf32>
    %5 = tpu.matmul %4, %2, %cst {dimension_numbers = #tpu.dot_dimension_numbers<[1], [0], [0], [1], [0, 0, 1, 1], [], []>} : vector<16x16xf32>, vector<16x16xf32>, vector<16x16xf32> -> vector<16x16xf32>
    %cst_7 = arith.constant dense<0.000000e+00> : vector<16x16xf32>
    %6 = tpu.matmul %4, %3, %cst_7 {dimension_numbers = #tpu.dot_dimension_numbers<[1], [0], [0], [1], [0, 0, 1, 1], [], []>} : vector<16x16xf32>, vector<16x16xf32>, vector<16x16xf32> -> vector<16x16xf32>
    %7 = vector.extract_strided_slice %5 {offsets = [0, 0], sizes = [8, 16], strides = [1, 1]} : vector<16x16xf32> to vector<8x16xf32>
    %8 = vector.extract_strided_slice %6 {offsets = [8, 0], sizes = [8, 16], strides = [1, 1]} : vector<16x16xf32> to vector<8x16xf32>
    %9 = arith.addf %7, %8 : vector<8x16xf32>
    %10 = vector.extract_strided_slice %5 {offsets = [8, 0], sizes = [8, 16], strides = [1, 1]} : vector<16x16xf32> to vector<8x16xf32>
    %11 = vector.extract_strided_slice %6 {offsets = [0, 0], sizes = [8, 16], strides = [1, 1]} : vector<16x16xf32> to vector<8x16xf32>
    %12 = arith.subf %10, %11 : vector<8x16xf32>
    %13 = tpu.concatenate %9, %12 in 0 : vector<8x16xf32>, vector<8x16xf32> -> vector<16x16xf32>
    %c0_8 = arith.constant 0 : index
    %c0_9 = arith.constant 0 : index
    %14 = vector.load %arg5[%c0_8, %c0_9] : memref<16x4xf32, #tpu.memory_space<vmem>>, vector<16x4xf32>
    %cst_10 = arith.constant dense<0.000000e+00> : vector<16x4xf32>
    %15 = tpu.matmul %13, %14, %cst_10 {dimension_numbers = #tpu.dot_dimension_numbers<[1], [0], [0], [1], [0, 0, 1, 1], [], []>} : vector<16x16xf32>, vector<16x4xf32>, vector<16x4xf32> -> vector<16x4xf32>
    %c0_11 = arith.constant 0 : index
    %c0_12 = arith.constant 0 : index
    %16 = vector.load %arg6[%c0_11, %c0_12] : memref<1x4xf32, #tpu.memory_space<vmem>>, vector<1x4xf32>
    %17 = vector.broadcast %16 : vector<1x4xf32> to vector<16x4xf32>
    %18 = arith.addf %15, %17 : vector<16x4xf32>
    %cst_13 = arith.constant 0.000000e+00 : f32
    %19 = vector.broadcast %cst_13 : f32 to vector<16x4xf32>
    %20 = arith.maximumf %18, %19 : vector<16x4xf32>
    %c0_14 = arith.constant 0 : index
    %c0_15 = arith.constant 0 : index
    %21 = vector.load %arg7[%c0_14, %c0_15] : memref<4x16xf32, #tpu.memory_space<vmem>>, vector<4x16xf32>
    %cst_16 = arith.constant dense<0.000000e+00> : vector<16x16xf32>
    %22 = tpu.matmul %20, %21, %cst_16 {dimension_numbers = #tpu.dot_dimension_numbers<[1], [0], [0], [1], [0, 0, 1, 1], [], []>} : vector<16x4xf32>, vector<4x16xf32>, vector<16x16xf32> -> vector<16x16xf32>
    %c0_17 = arith.constant 0 : index
    %c0_18 = arith.constant 0 : index
    %23 = vector.load %arg8[%c0_17, %c0_18] : memref<1x16xf32, #tpu.memory_space<vmem>>, vector<1x16xf32>
    %24 = vector.broadcast %23 : vector<1x16xf32> to vector<16x16xf32>
    %25 = arith.addf %22, %24 : vector<16x16xf32>
    %26 = math.tanh %25 : vector<16x16xf32>
    %27 = arith.mulf %26, %13 : vector<16x16xf32>
    %cst_19 = arith.constant dense<0.000000e+00> : vector<16x16xf32>
    %28 = tpu.matmul %27, %2, %cst_19 {dimension_numbers = #tpu.dot_dimension_numbers<[1], [0], [0], [1], [0, 0, 1, 1], [], []>} : vector<16x16xf32>, vector<16x16xf32>, vector<16x16xf32> -> vector<16x16xf32>
    %cst_20 = arith.constant dense<0.000000e+00> : vector<16x16xf32>
    %29 = tpu.matmul %27, %3, %cst_20 {dimension_numbers = #tpu.dot_dimension_numbers<[1], [0], [0], [1], [0, 0, 1, 1], [], []>} : vector<16x16xf32>, vector<16x16xf32>, vector<16x16xf32> -> vector<16x16xf32>
    %30 = vector.extract_strided_slice %28 {offsets = [0, 0], sizes = [8, 16], strides = [1, 1]} : vector<16x16xf32> to vector<8x16xf32>
    %31 = vector.extract_strided_slice %29 {offsets = [8, 0], sizes = [8, 16], strides = [1, 1]} : vector<16x16xf32> to vector<8x16xf32>
    %32 = arith.subf %30, %31 : vector<8x16xf32>
    %cst_21 = arith.constant 6.250000e-02 : f32
    %33 = vector.broadcast %cst_21 : f32 to vector<8x16xf32>
    %34 = arith.mulf %32, %33 : vector<8x16xf32>
    %35 = vector.extract_strided_slice %29 {offsets = [0, 0], sizes = [8, 16], strides = [1, 1]} : vector<16x16xf32> to vector<8x16xf32>
    %36 = vector.extract_strided_slice %28 {offsets = [8, 0], sizes = [8, 16], strides = [1, 1]} : vector<16x16xf32> to vector<8x16xf32>
    %37 = arith.addf %35, %36 : vector<8x16xf32>
    %cst_22 = arith.constant 6.250000e-02 : f32
    %38 = vector.broadcast %cst_22 : f32 to vector<8x16xf32>
    %39 = arith.mulf %37, %38 : vector<8x16xf32>
    %40 = arith.addf %34, %0 : vector<8x16xf32>
    %c0_23 = arith.constant 0 : index
    %c0_24 = arith.constant 0 : index
    %41 = vector.load %arg9[%c0_23, %c0_24] : memref<8x16xf32, #tpu.memory_space<vmem>>, vector<8x16xf32>
    tpu.vector_store %arg9[%c0_23, %c0_24], %40 {strides = array<i32>} : memref<8x16xf32, #tpu.memory_space<vmem>>, vector<8x16xf32>,
    %42 = arith.addf %39, %1 : vector<8x16xf32>
    %c0_25 = arith.constant 0 : index
    %c0_26 = arith.constant 0 : index
    %43 = vector.load %arg10[%c0_25, %c0_26] : memref<8x16xf32, #tpu.memory_space<vmem>>, vector<8x16xf32>
    tpu.vector_store %arg10[%c0_25, %c0_26], %42 {strides = array<i32>} : memref<8x16xf32, #tpu.memory_space<vmem>>, vector<8x16xf32>,
    return
  }
  func.func @transform_0(%arg0: i32) -> (i32, i32) {
    %c0_i32 = arith.constant 0 : i32
    %c0_i32_0 = arith.constant 0 : i32
    return %arg0, %c0_i32 : i32, i32
  }
  func.func @transform_1(%arg0: i32) -> (i32, i32) {
    %c0_i32 = arith.constant 0 : i32
    %c0_i32_0 = arith.constant 0 : i32
    return %arg0, %c0_i32 : i32, i32
  }
  func.func @transform_2(%arg0: i32) -> (i32, i32) {
    %c0_i32 = arith.constant 0 : i32
    %c0_i32_0 = arith.constant 0 : i32
    %c0_i32_1 = arith.constant 0 : i32
    return %c0_i32, %c0_i32_0 : i32, i32
  }
  func.func @transform_3(%arg0: i32) -> (i32, i32) {
    %c0_i32 = arith.constant 0 : i32
    %c0_i32_0 = arith.constant 0 : i32
    %c0_i32_1 = arith.constant 0 : i32
    return %c0_i32, %c0_i32_0 : i32, i32
  }
  func.func @transform_4(%arg0: i32) -> (i32, i32) {
    %c0_i32 = arith.constant 0 : i32
    %c0_i32_0 = arith.constant 0 : i32
    %c0_i32_1 = arith.constant 0 : i32
    return %c0_i32, %c0_i32_0 : i32, i32
  }
  func.func @transform_5(%arg0: i32) -> (i32, i32) {
    %c0_i32 = arith.constant 0 : i32
    %c0_i32_0 = arith.constant 0 : i32
    %c0_i32_1 = arith.constant 0 : i32
    return %c0_i32, %c0_i32_0 : i32, i32
  }
  func.func @transform_6(%arg0: i32) -> (i32, i32) {
    %c0_i32 = arith.constant 0 : i32
    %c0_i32_0 = arith.constant 0 : i32
    %c0_i32_1 = arith.constant 0 : i32
    return %c0_i32, %c0_i32_0 : i32, i32
  }
  func.func @transform_7(%arg0: i32) -> (i32, i32) {
    %c0_i32 = arith.constant 0 : i32
    %c0_i32_0 = arith.constant 0 : i32
    %c0_i32_1 = arith.constant 0 : i32
    return %c0_i32, %c0_i32_0 : i32, i32
  }
  func.func @transform_8(%arg0: i32) -> (i32, i32) {
    %c0_i32 = arith.constant 0 : i32
    %c0_i32_0 = arith.constant 0 : i32
    return %arg0, %c0_i32 : i32, i32
  }
  func.func @transform_9(%arg0: i32) -> (i32, i32) {
    %c0_i32 = arith.constant 0 : i32
    %c0_i32_0 = arith.constant 0 : i32
    return %arg0, %c0_i32 : i32, i32
  }
}

</mosaic_0001>

<llo_original>
// kernel: tpu_custom_call.1
$region0: #{tpu_custom_call.1}
  #allocation0 [shape = 'u32[]', space=smem, size = 0x4, offset = 0x4, fixed_abs, tag = 'smem constant byte address 0x4 - core index']
  #allocation1 [shape = 'u32[144,128]{1,0:T(1,128)}', space=vmem, size = 0x12000, scoped, tag = 'internal scratch']
  %s0 = inlined_call_operand.vmem [shape: f32[8,16], index: 0, kind: input, shape index: {}]
  %s1 = inlined_call_operand.hbm [shape: f32[8,16], index: 1, kind: input, shape index: {}]
  %s2 = inlined_call_operand.vmem [shape: f32[16,16], index: 2, kind: input, shape index: {}]
  %s3 = inlined_call_operand.hbm [shape: f32[16,16], index: 3, kind: input, shape index: {}]
  %s4 = inlined_call_operand.vmem [shape: f32[16,4], index: 4, kind: input, shape index: {}]
  %s5 = inlined_call_operand.vmem [shape: f32[1,4], index: 5, kind: input, shape index: {}]
  %s6 = inlined_call_operand.vmem [shape: f32[4,16], index: 6, kind: input, shape index: {}]
  %s7 = inlined_call_operand.vmem [shape: f32[1,16], index: 7, kind: input, shape index: {}]
  %s8 = inlined_call_operand.hbm [shape: f32[8,16], index: 8, kind: output, shape index: {0}]
  %s9 = inlined_call_operand.hbm [shape: f32[8,16], index: 9, kind: output, shape index: {1}]
  %10 = xla_tuple %s8, %s9
  %s11 = sld [smem:[#allocation0]]
  $region58: #{tpu_custom_call.1} parent=0
    _
  %s13 = ssub.s32 1, %s11
  %s14 = scalar_select 0, %s13, %s11
  $region1: #{tpu_custom_call.1} parent=0
    #allocation2 [shape = 'u8[4096]{0}', space=vmem, size = 0x1000, scoped, tag = 'input window, operand 1, single buffered']
    #allocation3 [shape = 's32[1]{0}', space=sflag, size = 0x4, scoped, tag = 'scoped memory for tpu_custom_call.1']
    #allocation4 [shape = 's32[1]{0}', space=sflag, size = 0x4, scoped, tag = 'scoped memory for tpu_custom_call.1']
    #allocation5 [shape = 'u8[8192]{0}', space=vmem, size = 0x2000, scoped, tag = 'input window, operand 3, single buffered']
    #allocation6 [shape = 's32[1]{0}', space=sflag, size = 0x4, scoped, tag = 'scoped memory for tpu_custom_call.1']
    #allocation7 [shape = 'u8[4096]{0}', space=vmem, size = 0x1000, scoped, tag = 'output window, operand 0, single buffered']
    #allocation8 [shape = 'u8[4096]{0}', space=vmem, size = 0x1000, scoped, tag = 'output window, operand 1, single buffered']
    #allocation9 [shape = 's32[1]{0}', space=sflag, size = 0x4, scoped, tag = 'scoped memory for tpu_custom_call.1']
    %15 = vsyncpa [#allocation3], 0
    %16 = vsyncpa [#allocation6], 0
    %17 = vsyncpa [#allocation4], 0
    %18 = vsyncpa [#allocation9], 0
    // Predicated region
    $region2: #{tpu_custom_call.1} parent=1 // pred_check
      _
    $region3: #{tpu_custom_call.1} parent=1 // pred_check_branch
      %20 = sbr.rel (0) target = $region5
    $region4: #{tpu_custom_call.1} parent=1 // pred_region
      _
    $region5: #{tpu_custom_call.1} parent=1 // pred_fallthru
      _
    // Predicated region
    $region6: #{tpu_custom_call.1} parent=1 // pred_check
      _
    $region7: #{tpu_custom_call.1} parent=1 // pred_check_branch
      %22 = sbr.rel (0) target = $region9
    $region8: #{tpu_custom_call.1} parent=1 // pred_region
      %s24 = ssub.s32 128, 128
      %25 = vsyncadd [#allocation3], %s24
      %s27 = sshll.u32 [#allocation2], 4
      %s28 = int_to_ptr.vmem [resolvable:$true] %s27
      %30 = dma.hbm_to_vmem [thread:$0]  %s1, 128, %s28, [#allocation3]
    $region9: #{tpu_custom_call.1} parent=1 // pred_fallthru
      _
    // Predicated region
    $region10: #{tpu_custom_call.1} parent=1 // pred_check
      _
    $region11: #{tpu_custom_call.1} parent=1 // pred_check_branch
      %32 = sbr.rel (0) target = $region13
    $region12: #{tpu_custom_call.1} parent=1 // pred_region
      _
    $region13: #{tpu_custom_call.1} parent=1 // pred_fallthru
      _
    // Predicated region
    $region14: #{tpu_custom_call.1} parent=1 // pred_check
      _
    $region15: #{tpu_custom_call.1} parent=1 // pred_check_branch
      %34 = sbr.rel (0) target = $region17
    $region16: #{tpu_custom_call.1} parent=1 // pred_region
      %s36 = ssub.s32 256, 256
      %37 = vsyncadd [#allocation6], %s36
      %s38 = sshll.u32 [#allocation5], 4
      %s39 = int_to_ptr.vmem [resolvable:$true] %s38
      %44 = dma.hbm_to_vmem [thread:$0]  %s3, 256, %s39, [#allocation6], 128, 128, 8
    $region17: #{tpu_custom_call.1} parent=1 // pred_fallthru
      _
    // Predicated region
    $region18: #{tpu_custom_call.1} parent=1 // pred_check
      _
    $region19: #{tpu_custom_call.1} parent=1 // pred_check_branch
      %46 = sbr.rel (0) target = $region21
    $region20: #{tpu_custom_call.1} parent=1 // pred_region
      _
    $region21: #{tpu_custom_call.1} parent=1 // pred_fallthru
      _
    // Predicated region
    $region22: #{tpu_custom_call.1} parent=1 // pred_check
      _
    $region23: #{tpu_custom_call.1} parent=1 // pred_check_branch
      %48 = sbr.rel (0) target = $region25
    $region24: #{tpu_custom_call.1} parent=1 // pred_region
      _
    $region25: #{tpu_custom_call.1} parent=1 // pred_fallthru
      _
    // Predicated region
    $region26: #{tpu_custom_call.1} parent=1 // pred_check
      _
    $region27: #{tpu_custom_call.1} parent=1 // pred_check_branch
      %50 = sbr.rel (0) target = $region29
    $region28: #{tpu_custom_call.1} parent=1 // pred_region
      _
    $region29: #{tpu_custom_call.1} parent=1 // pred_fallthru
      _
    // Predicated region
    $region30: #{tpu_custom_call.1} parent=1 // pred_check
      _
    $region31: #{tpu_custom_call.1} parent=1 // pred_check_branch
      %52 = sbr.rel (0) target = $region33
    $region32: #{tpu_custom_call.1} parent=1 // pred_region
      _
    $region33: #{tpu_custom_call.1} parent=1 // pred_fallthru
      _
    // Predicated region
    $region34: #{tpu_custom_call.1} parent=1 // pred_check
      _
    $region35: #{tpu_custom_call.1} parent=1 // pred_check_branch
      %54 = sbr.rel (0) target = $region37
    $region36: #{tpu_custom_call.1} parent=1 // pred_region
      %55 = dma.done [#allocation3], 128
    $region37: #{tpu_custom_call.1} parent=1 // pred_fallthru
      _
    // Predicated region
    $region38: #{tpu_custom_call.1} parent=1 // pred_check
      _
    $region39: #{tpu_custom_call.1} parent=1 // pred_check_branch
      %57 = sbr.rel (0) target = $region41
    $region40: #{tpu_custom_call.1} parent=1 // pred_region
      %58 = dma.done [#allocation6], 256
    $region41: #{tpu_custom_call.1} parent=1 // pred_fallthru
      _
    %v59 = vld [vmem:[%s0] sm:$0xff]
    %v60 = vld [vmem:[#allocation2] sm:$0xff]
    %v61 = vld [vmem:[%s2] sm:$0xff]
    %v62 = vld [vmem:[%s2 + $0x8] sm:$0xff]
    %v63 = vld [vmem:[#allocation5] sm:$0xff]
    %v64 = vld [vmem:[#allocation5 + $0x8] sm:$0xff]
    %vm65 = vcmask 130048
    %v67 = vsel %vm65, %v59, 0
    %v70 = vsel %vm65, %v60, 0
    %72 = vmatprep.subr.mxu0 0.0
    %73 = vmatpush1.msra.mxu0 %v61
    %74 = vmatprep.subr.mxu0 0.0
    %75 = vmatpush1.msra.mxu0 %v62
    %76 = vmatprep.subr.mxu0 0.0
    %77 = vmatpush1.msra.mxu0 0.0
    %78 = vmatprep.subr.mxu0 0.0
    %79 = vmatpush1.msra.mxu0 0.0
    %80 = vmatprep.subr.mxu0 0.0
    %81 = vmatpush1.msra.mxu0 0.0
    %82 = vmatprep.subr.mxu0 0.0
    %83 = vmatpush1.msra.mxu0 0.0
    %84 = vmatprep.subr.mxu0 0.0
    %85 = vmatpush1.msra.mxu0 0.0
    %86 = vmatprep.subr.mxu0 0.0
    %87 = vmatpush1.msra.mxu0 0.0
    %88 = vmatprep.subr.mxu0 0.0
    %89 = vmatpush1.msra.mxu0 0.0
    %90 = vmatprep.subr.mxu0 0.0
    %91 = vmatpush1.msra.mxu0 0.0
    %92 = vmatprep.subr.mxu0 0.0
    %93 = vmatpush1.msra.mxu0 0.0
    %94 = vmatprep.subr.mxu0 0.0
    %95 = vmatpush1.msra.mxu0 0.0
    %96 = vmatprep.subr.mxu0 0.0
    %97 = vmatpush1.msra.mxu0 0.0
    %98 = vmatprep.subr.mxu0 0.0
    %99 = vmatpush1.msra.mxu0 0.0
    %100 = vmatprep.subr.mxu0 0.0
    %101 = vmatpush1.msra.mxu0 0.0
    %102 = vmatprep.subr.mxu0 0.0
    %103 = vmatpush1.msra.mxu0 0.0
    %104 = vmatprep.subr.mxu0 0.0
    %105 = vmatpush1.msra.mxu0 0.0
    %106 = vmatprep.subr.mxu0 0.0
    %107 = vmatpush1.msra.mxu0 0.0
    %108 = vmatprep.subr.mxu0 0.0
    %109 = vmatpush1.msra.mxu0 0.0
    %110 = vmatprep.subr.mxu0 0.0
    %111 = vmatpush1.msra.mxu0 0.0
    %112 = vmatprep.subr.mxu0 0.0
    %113 = vmatpush1.msra.mxu0 0.0
    %114 = vmatprep.subr.mxu0 0.0
    %115 = vmatpush1.msra.mxu0 0.0
    %116 = vmatprep.subr.mxu0 0.0
    %117 = vmatpush1.msra.mxu0 0.0
    %118 = vmatprep.subr.mxu0 0.0
    %119 = vmatpush1.msra.mxu0 0.0
    %120 = vmatprep.subr.mxu0 0.0
    %121 = vmatpush1.msra.mxu0 0.0
    %122 = vmatprep.subr.mxu0 0.0
    %123 = vmatpush1.msra.mxu0 0.0
    %124 = vmatprep.subr.mxu0 0.0
    %125 = vmatpush1.msra.mxu0 0.0
    %126 = vmatprep.subr.mxu0 0.0
    %127 = vmatpush1.msra.mxu0 0.0
    %128 = vmatprep.subr.mxu0 0.0
    %129 = vmatpush1.msra.mxu0 0.0
    %130 = vmatprep.subr.mxu0 0.0
    %131 = vmatpush1.msra.mxu0 0.0
    %132 = vmatprep.subr.mxu0 0.0
    %133 = vmatpush1.msra.mxu0 0.0
    %134 = vmatprep.subr.mxu0 0.0
    %135 = vmatpush1.msra.mxu0 0.0
    %136 = vmatprep.mubr.f32.mxu0 0.0
    %137 = vmatmul.mubr.f32.gmra.mrb[0].mxu0 %v67
    %v138 = vpop.f32.mrb[0].mxu0
    %v139 = vadd.f32 0.0, %v138
    %v140 = vpop.f32.mrb[0].mxu0
    %141 = vmatprep.mubr.f32.mxu0 0.0
    %142 = vmatmul.mubr.f32.gmra.mrb[0].mxu0 %v70
    %v143 = vpop.f32.mrb[0].mxu0
    %v144 = vadd.f32 0.0, %v143
    %v145 = vpop.f32.mrb[0].mxu0
    %146 = vdwg.mxu0
    %147 = vmatprep.subr.mxu0 0.0
    %148 = vmatpush1.msra.mxu0 %v63
    %149 = vmatprep.subr.mxu0 0.0
    %150 = vmatpush1.msra.mxu0 %v64
    %151 = vmatprep.subr.mxu0 0.0
    %152 = vmatpush1.msra.mxu0 0.0
    %153 = vmatprep.subr.mxu0 0.0
    %154 = vmatpush1.msra.mxu0 0.0
    %155 = vmatprep.subr.mxu0 0.0
    %156 = vmatpush1.msra.mxu0 0.0
    %157 = vmatprep.subr.mxu0 0.0
    %158 = vmatpush1.msra.mxu0 0.0
    %159 = vmatprep.subr.mxu0 0.0
    %160 = vmatpush1.msra.mxu0 0.0
    %161 = vmatprep.subr.mxu0 0.0
    %162 = vmatpush1.msra.mxu0 0.0
    %163 = vmatprep.subr.mxu0 0.0
    %164 = vmatpush1.msra.mxu0 0.0
    %165 = vmatprep.subr.mxu0 0.0
    %166 = vmatpush1.msra.mxu0 0.0
    %167 = vmatprep.subr.mxu0 0.0
    %168 = vmatpush1.msra.mxu0 0.0
    %169 = vmatprep.subr.mxu0 0.0
    %170 = vmatpush1.msra.mxu0 0.0
    %171 = vmatprep.subr.mxu0 0.0
    %172 = vmatpush1.msra.mxu0 0.0
    %173 = vmatprep.subr.mxu0 0.0
    %174 = vmatpush1.msra.mxu0 0.0
    %175 = vmatprep.subr.mxu0 0.0
    %176 = vmatpush1.msra.mxu0 0.0
    %177 = vmatprep.subr.mxu0 0.0
    %178 = vmatpush1.msra.mxu0 0.0
    %179 = vmatprep.subr.mxu0 0.0
    %180 = vmatpush1.msra.mxu0 0.0
    %181 = vmatprep.subr.mxu0 0.0
    %182 = vmatpush1.msra.mxu0 0.0
    %183 = vmatprep.subr.mxu0 0.0
    %184 = vmatpush1.msra.mxu0 0.0
    %185 = vmatprep.subr.mxu0 0.0
    %186 = vmatpush1.msra.mxu0 0.0
    %187 = vmatprep.subr.mxu0 0.0
    %188 = vmatpush1.msra.mxu0 0.0
    %189 = vmatprep.subr.mxu0 0.0
    %190 = vmatpush1.msra.mxu0 0.0
    %191 = vmatprep.subr.mxu0 0.0
    %192 = vmatpush1.msra.mxu0 0.0
    %193 = vmatprep.subr.mxu0 0.0
    %194 = vmatpush1.msra.mxu0 0.0
    %195 = vmatprep.subr.mxu0 0.0
    %196 = vmatpush1.msra.mxu0 0.0
    %197 = vmatprep.subr.mxu0 0.0
    %198 = vmatpush1.msra.mxu0 0.0
    %199 = vmatprep.subr.mxu0 0.0
    %200 = vmatpush1.msra.mxu0 0.0
    %201 = vmatprep.subr.mxu0 0.0
    %202 = vmatpush1.msra.mxu0 0.0
    %203 = vmatprep.subr.mxu0 0.0
    %204 = vmatpush1.msra.mxu0 0.0
    %205 = vmatprep.subr.mxu0 0.0
    %206 = vmatpush1.msra.mxu0 0.0
    %207 = vmatprep.subr.mxu0 0.0
    %208 = vmatpush1.msra.mxu0 0.0
    %209 = vmatprep.subr.mxu0 0.0
    %210 = vmatpush1.msra.mxu0 0.0
    %211 = vmatprep.mubr.f32.mxu0 0.0
    %212 = vmatmul.mubr.f32.gmra.mrb[0].mxu0 %v67
    %v213 = vpop.f32.mrb[0].mxu0
    %v214 = vadd.f32 0.0, %v213
    %v215 = vpop.f32.mrb[0].mxu0
    %216 = vmatprep.mubr.f32.mxu0 0.0
    %217 = vmatmul.mubr.f32.gmra.mrb[0].mxu0 %v70
    %v218 = vpop.f32.mrb[0].mxu0
    %v219 = vadd.f32 0.0, %v218
    %v220 = vpop.f32.mrb[0].mxu0
    %221 = vdwg.mxu0
    %v222 = vadd.f32 %v139, %v219
    %v223 = vsub.f32 %v144, %v214
    %v224 = vld [vmem:[%s4] sm:$0xff]
    %v225 = vld [vmem:[%s4 + $0x8] sm:$0xff]
    %v226 = vld [vmem:[%s5] sm:$0x1]
    %v228 = vlaneseq
    %v229 = vshrl.u32 %v228, 7
    %v230 = vsub.s32 0, %v229
    %v231 = vrot.slane %v226, %v230
    %v234 = vsel %vm65, %v222, 0
    %v237 = vsel %vm65, %v223, 0
    %239 = vmatprep.subr.mxu0 0.0
    %240 = vmatpush1.msra.mxu0 %v224
    %241 = vmatprep.subr.mxu0 0.0
    %242 = vmatpush1.msra.mxu0 %v225
    %243 = vmatprep.subr.mxu0 0.0
    %244 = vmatpush1.msra.mxu0 0.0
    %245 = vmatprep.subr.mxu0 0.0
    %246 = vmatpush1.msra.mxu0 0.0
    %247 = vmatprep.subr.mxu0 0.0
    %248 = vmatpush1.msra.mxu0 0.0
    %249 = vmatprep.subr.mxu0 0.0
    %250 = vmatpush1.msra.mxu0 0.0
    %251 = vmatprep.subr.mxu0 0.0
    %252 = vmatpush1.msra.mxu0 0.0
    %253 = vmatprep.subr.mxu0 0.0
    %254 = vmatpush1.msra.mxu0 0.0
    %255 = vmatprep.subr.mxu0 0.0
    %256 = vmatpush1.msra.mxu0 0.0
    %257 = vmatprep.subr.mxu0 0.0
    %258 = vmatpush1.msra.mxu0 0.0
    %259 = vmatprep.subr.mxu0 0.0
    %260 = vmatpush1.msra.mxu0 0.0
    %261 = vmatprep.subr.mxu0 0.0
    %262 = vmatpush1.msra.mxu0 0.0
    %263 = vmatprep.subr.mxu0 0.0
    %264 = vmatpush1.msra.mxu0 0.0
    %265 = vmatprep.subr.mxu0 0.0
    %266 = vmatpush1.msra.mxu0 0.0
    %267 = vmatprep.subr.mxu0 0.0
    %268 = vmatpush1.msra.mxu0 0.0
    %269 = vmatprep.subr.mxu0 0.0
    %270 = vmatpush1.msra.mxu0 0.0
    %271 = vmatprep.subr.mxu0 0.0
    %272 = vmatpush1.msra.mxu0 0.0
    %273 = vmatprep.subr.mxu0 0.0
    %274 = vmatpush1.msra.mxu0 0.0
    %275 = vmatprep.subr.mxu0 0.0
    %276 = vmatpush1.msra.mxu0 0.0
    %277 = vmatprep.subr.mxu0 0.0
    %278 = vmatpush1.msra.mxu0 0.0
    %279 = vmatprep.subr.mxu0 0.0
    %280 = vmatpush1.msra.mxu0 0.0
    %281 = vmatprep.subr.mxu0 0.0
    %282 = vmatpush1.msra.mxu0 0.0
    %283 = vmatprep.subr.mxu0 0.0
    %284 = vmatpush1.msra.mxu0 0.0
    %285 = vmatprep.subr.mxu0 0.0
    %286 = vmatpush1.msra.mxu0 0.0
    %287 = vmatprep.subr.mxu0 0.0
    %288 = vmatpush1.msra.mxu0 0.0
    %289 = vmatprep.subr.mxu0 0.0
    %290 = vmatpush1.msra.mxu0 0.0
    %291 = vmatprep.subr.mxu0 0.0
    %292 = vmatpush1.msra.mxu0 0.0
    %293 = vmatprep.subr.mxu0 0.0
    %294 = vmatpush1.msra.mxu0 0.0
    %295 = vmatprep.subr.mxu0 0.0
    %296 = vmatpush1.msra.mxu0 0.0
    %297 = vmatprep.subr.mxu0 0.0
    %298 = vmatpush1.msra.mxu0 0.0
    %299 = vmatprep.subr.mxu0 0.0
    %300 = vmatpush1.msra.mxu0 0.0
    %301 = vmatprep.subr.mxu0 0.0
    %302 = vmatpush1.msra.mxu0 0.0
    %303 = vmatprep.mubr.f32.mxu0 0.0
    %304 = vmatmul.mubr.f32.gmra.mrb[0].mxu0 %v234
    %v305 = vpop.f32.mrb[0].mxu0
    %v306 = vadd.f32 %v231, %v305
    %v307 = vpop.f32.mrb[0].mxu0
    %308 = vmatprep.mubr.f32.mxu0 0.0
    %309 = vmatmul.mubr.f32.gmra.mrb[0].mxu0 %v237
    %v310 = vpop.f32.mrb[0].mxu0
    %v311 = vadd.f32 %v231, %v310
    %v312 = vpop.f32.mrb[0].mxu0
    %313 = vdwg.mxu0
    %v314 = vmax.f32 %v306, 0.0
    %v315 = vmax.f32 %v311, 0.0
    %v316 = vld [vmem:[%s6] sm:$0xf]
    %v317 = vld [vmem:[%s7] sm:$0x1]
    %v319 = vlaneseq
    %v320 = vshrl.u32 %v319, 7
    %v321 = vsub.s32 0, %v320
    %v322 = vrot.slane %v317, %v321
    %vm324 = vcmask 31744
    %v326 = vsel %vm324, %v314, 0
    %v329 = vsel %vm324, %v315, 0
    %vm331 = vcmask 1043456
    %v333 = vsel %vm331, %v316, 0
    %335 = vmatprep.subr.mxu0 0.0
    %336 = vmatpush1.msra.mxu0 %v333
    %337 = vmatprep.subr.mxu0 0.0
    %338 = vmatpush1.msra.mxu0 0.0
    %339 = vmatprep.subr.mxu0 0.0
    %340 = vmatpush1.msra.mxu0 0.0
    %341 = vmatprep.subr.mxu0 0.0
    %342 = vmatpush1.msra.mxu0 0.0
    %343 = vmatprep.subr.mxu0 0.0
    %344 = vmatpush1.msra.mxu0 0.0
    %345 = vmatprep.subr.mxu0 0.0
    %346 = vmatpush1.msra.mxu0 0.0
    %347 = vmatprep.subr.mxu0 0.0
    %348 = vmatpush1.msra.mxu0 0.0
    %349 = vmatprep.subr.mxu0 0.0
    %350 = vmatpush1.msra.mxu0 0.0
    %351 = vmatprep.subr.mxu0 0.0
    %352 = vmatpush1.msra.mxu0 0.0
    %353 = vmatprep.subr.mxu0 0.0
    %354 = vmatpush1.msra.mxu0 0.0
    %355 = vmatprep.subr.mxu0 0.0
    %356 = vmatpush1.msra.mxu0 0.0
    %357 = vmatprep.subr.mxu0 0.0
    %358 = vmatpush1.msra.mxu0 0.0
    %359 = vmatprep.subr.mxu0 0.0
    %360 = vmatpush1.msra.mxu0 0.0
    %361 = vmatprep.subr.mxu0 0.0
    %362 = vmatpush1.msra.mxu0 0.0
    %363 = vmatprep.subr.mxu0 0.0
    %364 = vmatpush1.msra.mxu0 0.0
    %365 = vmatprep.subr.mxu0 0.0
    %366 = vmatpush1.msra.mxu0 0.0
    %367 = vmatprep.subr.mxu0 0.0
    %368 = vmatpush1.msra.mxu0 0.0
    %369 = vmatprep.subr.mxu0 0.0
    %370 = vmatpush1.msra.mxu0 0.0
    %371 = vmatprep.subr.mxu0 0.0
    %372 = vmatpush1.msra.mxu0 0.0
    %373 = vmatprep.subr.mxu0 0.0
    %374 = vmatpush1.msra.mxu0 0.0
    %375 = vmatprep.subr.mxu0 0.0
    %376 = vmatpush1.msra.mxu0 0.0
    %377 = vmatprep.subr.mxu0 0.0
    %378 = vmatpush1.msra.mxu0 0.0
    %379 = vmatprep.subr.mxu0 0.0
    %380 = vmatpush1.msra.mxu0 0.0
    %381 = vmatprep.subr.mxu0 0.0
    %382 = vmatpush1.msra.mxu0 0.0
    %383 = vmatprep.subr.mxu0 0.0
    %384 = vmatpush1.msra.mxu0 0.0
    %385 = vmatprep.subr.mxu0 0.0
    %386 = vmatpush1.msra.mxu0 0.0
    %387 = vmatprep.subr.mxu0 0.0
    %388 = vmatpush1.msra.mxu0 0.0
    %389 = vmatprep.subr.mxu0 0.0
    %390 = vmatpush1.msra.mxu0 0.0
    %391 = vmatprep.subr.mxu0 0.0
    %392 = vmatpush1.msra.mxu0 0.0
    %393 = vmatprep.subr.mxu0 0.0
    %394 = vmatpush1.msra.mxu0 0.0
    %395 = vmatprep.subr.mxu0 0.0
    %396 = vmatpush1.msra.mxu0 0.0
    %397 = vmatprep.subr.mxu0 0.0
    %398 = vmatpush1.msra.mxu0 0.0
    %399 = vmatprep.mubr.f32.mxu0 0.0
    %400 = vmatmul.mubr.f32.gmra.mrb[0].mxu0 %v326
    %v401 = vpop.f32.mrb[0].mxu0
    %v402 = vadd.f32 %v322, %v401
    %v403 = vpop.f32.mrb[0].mxu0
    %404 = vmatprep.mubr.f32.mxu0 0.0
    %405 = vmatmul.mubr.f32.gmra.mrb[0].mxu0 %v329
    %v406 = vpop.f32.mrb[0].mxu0
    %v407 = vadd.f32 %v322, %v406
    %v408 = vpop.f32.mrb[0].mxu0
    %409 = vdwg.mxu0
    %v410 = vtanh.pop %v402
    %v411 = vtanh.pop %v407
    %v412 = vmul.f32 %v410, %v222
    %v413 = vmul.f32 %v411, %v223
    %v415 = vsel %vm65, %v412, 0
    %v418 = vsel %vm65, %v413, 0
    %420 = vmatprep.subr.mxu0 0.0
    %421 = vmatpush1.msra.mxu0 %v61
    %422 = vmatprep.subr.mxu0 0.0
    %423 = vmatpush1.msra.mxu0 %v62
    %424 = vmatprep.subr.mxu0 0.0
    %425 = vmatpush1.msra.mxu0 0.0
    %426 = vmatprep.subr.mxu0 0.0
    %427 = vmatpush1.msra.mxu0 0.0
    %428 = vmatprep.subr.mxu0 0.0
    %429 = vmatpush1.msra.mxu0 0.0
    %430 = vmatprep.subr.mxu0 0.0
    %431 = vmatpush1.msra.mxu0 0.0
    %432 = vmatprep.subr.mxu0 0.0
    %433 = vmatpush1.msra.mxu0 0.0
    %434 = vmatprep.subr.mxu0 0.0
    %435 = vmatpush1.msra.mxu0 0.0
    %436 = vmatprep.subr.mxu0 0.0
    %437 = vmatpush1.msra.mxu0 0.0
    %438 = vmatprep.subr.mxu0 0.0
    %439 = vmatpush1.msra.mxu0 0.0
    %440 = vmatprep.subr.mxu0 0.0
    %441 = vmatpush1.msra.mxu0 0.0
    %442 = vmatprep.subr.mxu0 0.0
    %443 = vmatpush1.msra.mxu0 0.0
    %444 = vmatprep.subr.mxu0 0.0
    %445 = vmatpush1.msra.mxu0 0.0
    %446 = vmatprep.subr.mxu0 0.0
    %447 = vmatpush1.msra.mxu0 0.0
    %448 = vmatprep.subr.mxu0 0.0
    %449 = vmatpush1.msra.mxu0 0.0
    %450 = vmatprep.subr.mxu0 0.0
    %451 = vmatpush1.msra.mxu0 0.0
    %452 = vmatprep.subr.mxu0 0.0
    %453 = vmatpush1.msra.mxu0 0.0
    %454 = vmatprep.subr.mxu0 0.0
    %455 = vmatpush1.msra.mxu0 0.0
    %456 = vmatprep.subr.mxu0 0.0
    %457 = vmatpush1.msra.mxu0 0.0
    %458 = vmatprep.subr.mxu0 0.0
    %459 = vmatpush1.msra.mxu0 0.0
    %460 = vmatprep.subr.mxu0 0.0
    %461 = vmatpush1.msra.mxu0 0.0
    %462 = vmatprep.subr.mxu0 0.0
    %463 = vmatpush1.msra.mxu0 0.0
    %464 = vmatprep.subr.mxu0 0.0
    %465 = vmatpush1.msra.mxu0 0.0
    %466 = vmatprep.subr.mxu0 0.0
    %467 = vmatpush1.msra.mxu0 0.0
    %468 = vmatprep.subr.mxu0 0.0
    %469 = vmatpush1.msra.mxu0 0.0
    %470 = vmatprep.subr.mxu0 0.0
    %471 = vmatpush1.msra.mxu0 0.0
    %472 = vmatprep.subr.mxu0 0.0
    %473 = vmatpush1.msra.mxu0 0.0
    %474 = vmatprep.subr.mxu0 0.0
    %475 = vmatpush1.msra.mxu0 0.0
    %476 = vmatprep.subr.mxu0 0.0
    %477 = vmatpush1.msra.mxu0 0.0
    %478 = vmatprep.subr.mxu0 0.0
    %479 = vmatpush1.msra.mxu0 0.0
    %480 = vmatprep.subr.mxu0 0.0
    %481 = vmatpush1.msra.mxu0 0.0
    %482 = vmatprep.subr.mxu0 0.0
    %483 = vmatpush1.msra.mxu0 0.0
    %484 = vmatprep.mubr.f32.mxu0 0.0
    %485 = vmatmul.mubr.f32.gmra.mrb[0].mxu0 %v415
    %v486 = vpop.f32.mrb[0].mxu0
    %v487 = vadd.f32 0.0, %v486
    %v488 = vpop.f32.mrb[0].mxu0
    %489 = vmatprep.mubr.f32.mxu0 0.0
    %490 = vmatmul.mubr.f32.gmra.mrb[0].mxu0 %v418
    %v491 = vpop.f32.mrb[0].mxu0
    %v492 = vadd.f32 0.0, %v491
    %v493 = vpop.f32.mrb[0].mxu0
    %494 = vdwg.mxu0
    %495 = vmatprep.subr.mxu0 0.0
    %496 = vmatpush1.msra.mxu0 %v63
    %497 = vmatprep.subr.mxu0 0.0
    %498 = vmatpush1.msra.mxu0 %v64
    %499 = vmatprep.subr.mxu0 0.0
    %500 = vmatpush1.msra.mxu0 0.0
    %501 = vmatprep.subr.mxu0 0.0
    %502 = vmatpush1.msra.mxu0 0.0
    %503 = vmatprep.subr.mxu0 0.0
    %504 = vmatpush1.msra.mxu0 0.0
    %505 = vmatprep.subr.mxu0 0.0
    %506 = vmatpush1.msra.mxu0 0.0
    %507 = vmatprep.subr.mxu0 0.0
    %508 = vmatpush1.msra.mxu0 0.0
    %509 = vmatprep.subr.mxu0 0.0
    %510 = vmatpush1.msra.mxu0 0.0
    %511 = vmatprep.subr.mxu0 0.0
    %512 = vmatpush1.msra.mxu0 0.0
    %513 = vmatprep.subr.mxu0 0.0
    %514 = vmatpush1.msra.mxu0 0.0
    %515 = vmatprep.subr.mxu0 0.0
    %516 = vmatpush1.msra.mxu0 0.0
    %517 = vmatprep.subr.mxu0 0.0
    %518 = vmatpush1.msra.mxu0 0.0
    %519 = vmatprep.subr.mxu0 0.0
    %520 = vmatpush1.msra.mxu0 0.0
    %521 = vmatprep.subr.mxu0 0.0
    %522 = vmatpush1.msra.mxu0 0.0
    %523 = vmatprep.subr.mxu0 0.0
    %524 = vmatpush1.msra.mxu0 0.0
    %525 = vmatprep.subr.mxu0 0.0
    %526 = vmatpush1.msra.mxu0 0.0
    %527 = vmatprep.subr.mxu0 0.0
    %528 = vmatpush1.msra.mxu0 0.0
    %529 = vmatprep.subr.mxu0 0.0
    %530 = vmatpush1.msra.mxu0 0.0
    %531 = vmatprep.subr.mxu0 0.0
    %532 = vmatpush1.msra.mxu0 0.0
    %533 = vmatprep.subr.mxu0 0.0
    %534 = vmatpush1.msra.mxu0 0.0
    %535 = vmatprep.subr.mxu0 0.0
    %536 = vmatpush1.msra.mxu0 0.0
    %537 = vmatprep.subr.mxu0 0.0
    %538 = vmatpush1.msra.mxu0 0.0
    %539 = vmatprep.subr.mxu0 0.0
    %540 = vmatpush1.msra.mxu0 0.0
    %541 = vmatprep.subr.mxu0 0.0
    %542 = vmatpush1.msra.mxu0 0.0
    %543 = vmatprep.subr.mxu0 0.0
    %544 = vmatpush1.msra.mxu0 0.0
    %545 = vmatprep.subr.mxu0 0.0
    %546 = vmatpush1.msra.mxu0 0.0
    %547 = vmatprep.subr.mxu0 0.0
    %548 = vmatpush1.msra.mxu0 0.0
    %549 = vmatprep.subr.mxu0 0.0
    %550 = vmatpush1.msra.mxu0 0.0
    %551 = vmatprep.subr.mxu0 0.0
    %552 = vmatpush1.msra.mxu0 0.0
    %553 = vmatprep.subr.mxu0 0.0
    %554 = vmatpush1.msra.mxu0 0.0
    %555 = vmatprep.subr.mxu0 0.0
    %556 = vmatpush1.msra.mxu0 0.0
    %557 = vmatprep.subr.mxu0 0.0
    %558 = vmatpush1.msra.mxu0 0.0
    %559 = vmatprep.mubr.f32.mxu0 0.0
    %560 = vmatmul.mubr.f32.gmra.mrb[0].mxu0 %v415
    %v561 = vpop.f32.mrb[0].mxu0
    %v562 = vadd.f32 0.0, %v561
    %v563 = vpop.f32.mrb[0].mxu0
    %564 = vmatprep.mubr.f32.mxu0 0.0
    %565 = vmatmul.mubr.f32.gmra.mrb[0].mxu0 %v418
    %v566 = vpop.f32.mrb[0].mxu0
    %v567 = vadd.f32 0.0, %v566
    %v568 = vpop.f32.mrb[0].mxu0
    %569 = vdwg.mxu0
    %v570 = vsub.f32 %v487, %v567
    %v571 = vmul.f32 %v570, 0.0625
    %v572 = vadd.f32 %v562, %v492
    %v573 = vmul.f32 %v572, 0.0625
    %v574 = vadd.f32 %v571, %v59
    %575 = vst.msk [vmem:[#allocation7] sm:$0xff] %vm65, %v574
    %v576 = vadd.f32 %v573, %v60
    %577 = vst.msk [vmem:[#allocation8] sm:$0xff] %vm65, %v576
    // Predicated region
    $region42: #{tpu_custom_call.1} parent=1 // pred_check
      _
    $region43: #{tpu_custom_call.1} parent=1 // pred_check_branch
      %579 = sbr.rel (0) target = $region45
    $region44: #{tpu_custom_call.1} parent=1 // pred_region
      %s581 = ssub.s32 128, 128
      %582 = vsyncadd [#allocation4], %s581
      %s584 = sshll.u32 [#allocation7], 4
      %s585 = int_to_ptr.vmem [resolvable:$true] %s584
      %587 = dma.vmem_to_hbm [thread:$0]  %s585, 128, %s8, [#allocation4]
    $region45: #{tpu_custom_call.1} parent=1 // pred_fallthru
      _
    // Predicated region
    $region46: #{tpu_custom_call.1} parent=1 // pred_check
      _
    $region47: #{tpu_custom_call.1} parent=1 // pred_check_branch
      %589 = sbr.rel (0) target = $region49
    $region48: #{tpu_custom_call.1} parent=1 // pred_region
      %s591 = ssub.s32 128, 128
      %592 = vsyncadd [#allocation9], %s591
      %s594 = sshll.u32 [#allocation8], 4
      %s595 = int_to_ptr.vmem [resolvable:$true] %s594
      %597 = dma.vmem_to_hbm [thread:$0]  %s595, 128, %s9, [#allocation9]
    $region49: #{tpu_custom_call.1} parent=1 // pred_fallthru
      _
    // Predicated region
    $region50: #{tpu_custom_call.1} parent=1 // pred_check
      _
    $region51: #{tpu_custom_call.1} parent=1 // pred_check_branch
      %599 = sbr.rel (0) target = $region53
    $region52: #{tpu_custom_call.1} parent=1 // pred_region
      %600 = dma.done [#allocation4], 128
    $region53: #{tpu_custom_call.1} parent=1 // pred_fallthru
      _
    // Predicated region
    $region54: #{tpu_custom_call.1} parent=1 // pred_check
      _
    $region55: #{tpu_custom_call.1} parent=1 // pred_check_branch
      %602 = sbr.rel (0) target = $region57
    $region56: #{tpu_custom_call.1} parent=1 // pred_region
      %603 = dma.done [#allocation9], 128
    $region57: #{tpu_custom_call.1} parent=1 // pred_fallthru
      _
    %604 = vsyncpa [#allocation3], 1
    %605 = vsyncpa [#allocation6], 1
    %606 = vsyncpa [#allocation4], 1
    %607 = vsyncpa [#allocation9], 1

</llo_original>
